<compile_context>
chip_gen: v7x
topology: tpu7x:2x2x1
jax: 0.10.0
libtpu: 0.0.40
codegen_flags: <defaults>
</compile_context>

<pallas_src>
import jax
import jax.numpy as jnp
from jax.experimental import pallas as pl
from jax.experimental.pallas import tpu as pltpu


def _ffn_kernel(x_ref, w1_ref, b1_ref, w2_ref, b2_ref, o_ref):
    # Linear 1 + ReLU (MXU matmul, f32 accumulate)
    h = jnp.dot(x_ref[...], w1_ref[...], preferred_element_type=jnp.float32)
    h = jnp.maximum(h + b1_ref[...], 0.0)
    # Linear 2
    y = jnp.dot(h.astype(w2_ref.dtype), w2_ref[...],
                preferred_element_type=jnp.float32)
    o_ref[...] = (y + b2_ref[...]).astype(o_ref.dtype)


def _ffn_dropout_kernel(x_ref, w1_ref, b1_ref, w2_ref, b2_ref, mask_ref, o_ref):
    # Linear 1 + ReLU
    h = jnp.dot(x_ref[...], w1_ref[...], preferred_element_type=jnp.float32)
    h = jnp.maximum(h + b1_ref[...], 0.0)
    # Linear 2
    y = jnp.dot(h.astype(w2_ref.dtype), w2_ref[...],
                preferred_element_type=jnp.float32)
    # Inverted dropout: mask already holds keep/(1-p) in f32.
    y = (y + b2_ref[...]) * mask_ref[...]
    o_ref[...] = y.astype(o_ref.dtype)


def dropout_mask(key, shape, rate, dtype=jnp.float32):
    """Inverted-dropout scale: keep / (1 - rate)."""
    keep = jax.random.bernoulli(key, 1.0 - rate, shape)
    return keep.astype(dtype) * (1.0 / (1.0 - rate))


def _row_tile(M):
    # Biggest row tile that divides M (keeps (8,128) BlockSpec constraint);
    # fall back to the full extent if M is not a multiple of 8.
    for tm in (512, 256, 128, 64, 32, 16, 8):
        if M % tm == 0:
            return tm
    return M


def feed_forward(x, w1, b1, w2, b2, *, dropout_rate=0.3, training=True,
                 rng_key=None):
    """x: (B, T, C) float32. Returns (B, T, C)."""
    B, T, C = x.shape
    H = w1.shape[1]
    M = B * T
    x2 = x.reshape(M, C)

    tm = _row_tile(M)
    grid = (M // tm,)

    row_spec = pl.BlockSpec((tm, C), lambda i: (i, 0))
    in_specs = [
        row_spec,                                   # x tile
        pl.BlockSpec((C, H), lambda i: (0, 0)),     # w1 (resident)
        pl.BlockSpec((1, H), lambda i: (0, 0)),     # b1
        pl.BlockSpec((H, C), lambda i: (0, 0)),     # w2 (resident)
        pl.BlockSpec((1, C), lambda i: (0, 0)),     # b2
    ]
    args = [x2, w1, b1.reshape(1, H), w2, b2.reshape(1, C)]

    use_dropout = training and dropout_rate > 0.0
    if use_dropout:
        # TODO(synk): in-kernel hardware PRNG (pltpu.prng_seed/prng_random_bits)
        # is not lowerable in CPU interpret mode; mask is generated host-side
        # and fused into the second-matmul epilogue instead.
        if rng_key is None:
            rng_key = jax.random.PRNGKey(0)
        mask = dropout_mask(rng_key, (M, C), dropout_rate, jnp.float32)
        in_specs.append(pl.BlockSpec((tm, C), lambda i: (i, 0)))
        args.append(mask)
        kernel = _ffn_dropout_kernel
    else:
        kernel = _ffn_kernel

    out = pl.pallas_call(
        kernel,
        out_shape=jax.ShapeDtypeStruct((M, C), x.dtype),
        grid_spec=pltpu.PrefetchScalarGridSpec(
            num_scalar_prefetch=0,
            grid=grid,
            in_specs=in_specs,
            out_specs=pl.BlockSpec((tm, C), lambda i: (i, 0)),
        ),
        compiler_params=pltpu.CompilerParams(
            dimension_semantics=("parallel",)),
    )(*args)

    return out.reshape(B, T, C)


if __name__ == "__main__":
    # Small shapes consistent with the module's forward: x is (B, T, n_embd),
    # hidden = 4 * n_embd.
    B, T, n_embd = 2, 8, 128
    hidden = 4 * n_embd

    key = jax.random.PRNGKey(0)
    kx, k1, k2, k3, k4, kd = jax.random.split(key, 6)

    x = jax.random.normal(kx, (B, T, n_embd), dtype=jnp.float32)
    w1 = jax.random.normal(k1, (n_embd, hidden), dtype=jnp.float32) * 0.02
    b1 = jax.random.normal(k2, (hidden,), dtype=jnp.float32) * 0.02
    w2 = jax.random.normal(k3, (hidden, n_embd), dtype=jnp.float32) * 0.02
    b2 = jax.random.normal(k4, (n_embd,), dtype=jnp.float32) * 0.02

    # Eval path (dropout off): exact match vs pure-JAX reference.
    y_eval = feed_forward(x, w1, b1, w2, b2, dropout_rate=0.3, training=False)
    jax.block_until_ready(y_eval)
    ref = jnp.maximum(x.reshape(-1, n_embd) @ w1 + b1, 0.0) @ w2 + b2
    assert jnp.allclose(y_eval.reshape(-1, n_embd), ref, atol=1e-4, rtol=1e-4)

    # Training path (dropout p=0.3): mask is reproducible from the key, so the
    # fused kernel must match the mask-applied reference.
    y_train = feed_forward(x, w1, b1, w2, b2, dropout_rate=0.3, training=True,
                           rng_key=kd)
    jax.block_until_ready(y_train)
    mask = dropout_mask(kd, (B * T, n_embd), 0.3, jnp.float32)
    ref_train = (ref * mask).reshape(B, T, n_embd)
    assert y_train.shape == (B, T, n_embd)
    assert jnp.allclose(y_train, ref_train, atol=1e-4, rtol=1e-4)

    print("KERNEL_OK")
</pallas_src>

<mosaic_0001>
module attributes {stable_mosaic.version = 11 : i64} {
  func.func @_ffn_kernel(%arg0: i32, %arg1: memref<16x128xf32, #tpu.memory_space<vmem>>, %arg2: memref<128x512xf32, #tpu.memory_space<vmem>>, %arg3: memref<1x512xf32, #tpu.memory_space<vmem>>, %arg4: memref<512x128xf32, #tpu.memory_space<vmem>>, %arg5: memref<1x128xf32, #tpu.memory_space<vmem>>, %arg6: memref<16x128xf32, #tpu.memory_space<vmem>>) attributes {dimension_semantics = [#tpu.dimension_semantics<parallel>], iteration_bounds = array<i64: 1>, scalar_prefetch = 0 : i64, scratch_operands = 0 : i64, tpu.core_type = #tpu.core_type<tc>, window_params = [{transform_indices = @transform_0, window_bounds = array<i64: 16, 128>}, {pipeline_mode = #tpu.pipeline_mode<synchronous>, transform_indices = @transform_1, window_bounds = array<i64: 128, 512>}, {pipeline_mode = #tpu.pipeline_mode<synchronous>, transform_indices = @transform_2, window_bounds = array<i64: 1, 512>}, {pipeline_mode = #tpu.pipeline_mode<synchronous>, transform_indices = @transform_3, window_bounds = array<i64: 512, 128>}, {pipeline_mode = #tpu.pipeline_mode<synchronous>, transform_indices = @transform_4, window_bounds = array<i64: 1, 128>}, {transform_indices = @transform_5, window_bounds = array<i64: 16, 128>}]} {
    %c0 = arith.constant 0 : index
    %c0_0 = arith.constant 0 : index
    %0 = vector.load %arg1[%c0, %c0_0] : memref<16x128xf32, #tpu.memory_space<vmem>>, vector<16x128xf32>
    %c0_1 = arith.constant 0 : index
    %c0_2 = arith.constant 0 : index
    %1 = vector.load %arg2[%c0_1, %c0_2] : memref<128x512xf32, #tpu.memory_space<vmem>>, vector<128x512xf32>
    %cst = arith.constant dense<0.000000e+00> : vector<16x512xf32>
    %2 = tpu.matmul %0, %1, %cst {dimension_numbers = #tpu.dot_dimension_numbers<[1], [0], [0], [1], [0, 0, 1, 1], [], []>} : vector<16x128xf32>, vector<128x512xf32>, vector<16x512xf32> -> vector<16x512xf32>
    %c0_3 = arith.constant 0 : index
    %c0_4 = arith.constant 0 : index
    %3 = vector.load %arg3[%c0_3, %c0_4] : memref<1x512xf32, #tpu.memory_space<vmem>>, vector<1x512xf32>
    %4 = vector.broadcast %3 : vector<1x512xf32> to vector<16x512xf32>
    %5 = arith.addf %2, %4 : vector<16x512xf32>
    %cst_5 = arith.constant 0.000000e+00 : f32
    %6 = vector.broadcast %cst_5 : f32 to vector<16x512xf32>
    %7 = arith.maximumf %5, %6 : vector<16x512xf32>
    %c0_6 = arith.constant 0 : index
    %c0_7 = arith.constant 0 : index
    %8 = vector.load %arg4[%c0_6, %c0_7] : memref<512x128xf32, #tpu.memory_space<vmem>>, vector<512x128xf32>
    %cst_8 = arith.constant dense<0.000000e+00> : vector<16x128xf32>
    %9 = tpu.matmul %7, %8, %cst_8 {dimension_numbers = #tpu.dot_dimension_numbers<[1], [0], [0], [1], [0, 0, 1, 1], [], []>} : vector<16x512xf32>, vector<512x128xf32>, vector<16x128xf32> -> vector<16x128xf32>
    %c0_9 = arith.constant 0 : index
    %c0_10 = arith.constant 0 : index
    %10 = vector.load %arg5[%c0_9, %c0_10] : memref<1x128xf32, #tpu.memory_space<vmem>>, vector<1x128xf32>
    %11 = vector.broadcast %10 : vector<1x128xf32> to vector<16x128xf32>
    %12 = arith.addf %9, %11 : vector<16x128xf32>
    %c0_11 = arith.constant 0 : index
    %c0_12 = arith.constant 0 : index
    %13 = vector.load %arg6[%c0_11, %c0_12] : memref<16x128xf32, #tpu.memory_space<vmem>>, vector<16x128xf32>
    tpu.vector_store %arg6[%c0_11, %c0_12], %12 {strides = array<i32>} : memref<16x128xf32, #tpu.memory_space<vmem>>, vector<16x128xf32>,
    return
  }
  func.func @transform_0(%arg0: i32) -> (i32, i32) {
    %c0_i32 = arith.constant 0 : i32
    %c0_i32_0 = arith.constant 0 : i32
    return %arg0, %c0_i32 : i32, i32
  }
  func.func @transform_1(%arg0: i32) -> (i32, i32) {
    %c0_i32 = arith.constant 0 : i32
    %c0_i32_0 = arith.constant 0 : i32
    %c0_i32_1 = arith.constant 0 : i32
    return %c0_i32, %c0_i32_0 : i32, i32
  }
  func.func @transform_2(%arg0: i32) -> (i32, i32) {
    %c0_i32 = arith.constant 0 : i32
    %c0_i32_0 = arith.constant 0 : i32
    %c0_i32_1 = arith.constant 0 : i32
    return %c0_i32, %c0_i32_0 : i32, i32
  }
  func.func @transform_3(%arg0: i32) -> (i32, i32) {
    %c0_i32 = arith.constant 0 : i32
    %c0_i32_0 = arith.constant 0 : i32
    %c0_i32_1 = arith.constant 0 : i32
    return %c0_i32, %c0_i32_0 : i32, i32
  }
  func.func @transform_4(%arg0: i32) -> (i32, i32) {
    %c0_i32 = arith.constant 0 : i32
    %c0_i32_0 = arith.constant 0 : i32
    %c0_i32_1 = arith.constant 0 : i32
    return %c0_i32, %c0_i32_0 : i32, i32
  }
  func.func @transform_5(%arg0: i32) -> (i32, i32) {
    %c0_i32 = arith.constant 0 : i32
    %c0_i32_0 = arith.constant 0 : i32
    return %arg0, %c0_i32 : i32, i32
  }
}

</mosaic_0001>

<llo_original>
// kernel: tpu_custom_call.1
$region0: #{tpu_custom_call.1}
  #allocation0 [shape = 'u32[]', space=smem, size = 0x4, offset = 0x4, fixed_abs, tag = 'smem constant byte address 0x4 - core index']
  #allocation1 [shape = 'u32[144,128]{1,0:T(1,128)}', space=vmem, size = 0x12000, scoped, tag = 'internal scratch']
  %s0 = inlined_call_operand.hbm [shape: f32[16,128], index: 0, kind: input, shape index: {}]
  %s1 = inlined_call_operand.hbm [shape: f32[128,512], index: 1, kind: input, shape index: {}]
  %s2 = inlined_call_operand.vmem [shape: f32[1,512], index: 2, kind: input, shape index: {}]
  %s3 = inlined_call_operand.hbm [shape: f32[512,128], index: 3, kind: input, shape index: {}]
  %s4 = inlined_call_operand.vmem [shape: f32[1,128], index: 4, kind: input, shape index: {}]
  %s5 = inlined_call_operand.hbm [shape: f32[16,128], index: 5, kind: output, shape index: {}]
  %s6 = sld [smem:[#allocation0]]
  $region42: #{tpu_custom_call.1} parent=0
    _
  %s8 = ssub.s32 1, %s6
  %s9 = scalar_select 0, %s8, %s6
  $region1: #{tpu_custom_call.1} parent=0
    #allocation2 [shape = 'u8[8192]{0}', space=vmem, size = 0x2000, scoped, tag = 'input window, operand 0, single buffered']
    #allocation3 [shape = 's32[1]{0}', space=sflag, size = 0x4, scoped, tag = 'scoped memory for tpu_custom_call.1']
    #allocation4 [shape = 's32[1]{0}', space=sflag, size = 0x4, scoped, tag = 'scoped memory for tpu_custom_call.1']
    #allocation5 [shape = 'u8[262144]{0}', space=vmem, size = 0x40000, scoped, tag = 'input window, operand 1, single buffered']
    #allocation6 [shape = 's32[1]{0}', space=sflag, size = 0x4, scoped, tag = 'scoped memory for tpu_custom_call.1']
    #allocation7 [shape = 'u8[262144]{0}', space=vmem, size = 0x40000, scoped, tag = 'input window, operand 3, single buffered']
    #allocation8 [shape = 'u8[8192]{0}', space=vmem, size = 0x2000, scoped, tag = 'output window, operand 0, single buffered']
    %10 = vsyncpa [#allocation3], 0
    %11 = vsyncpa [#allocation6], 0
    %12 = vsyncpa [#allocation4], 0
    // Predicated region
    $region2: #{tpu_custom_call.1} parent=1 // pred_check
      _
    $region3: #{tpu_custom_call.1} parent=1 // pred_check_branch
      %14 = sbr.rel (0) target = $region5
    $region4: #{tpu_custom_call.1} parent=1 // pred_region
      %s16 = ssub.s32 256, 256
      %17 = vsyncadd [#allocation3], %s16
      %s18 = sshll.u32 [#allocation2], 4
      %s19 = int_to_ptr.vmem [resolvable:$true] %s18
      %24 = dma.hbm_to_vmem [thread:$0]  %s0, 256, %s19, [#allocation3], 128, 128, 8
    $region5: #{tpu_custom_call.1} parent=1 // pred_fallthru
      _
    // Predicated region
    $region6: #{tpu_custom_call.1} parent=1 // pred_check
      _
    $region7: #{tpu_custom_call.1} parent=1 // pred_check_branch
      %26 = sbr.rel (0) target = $region9
    $region8: #{tpu_custom_call.1} parent=1 // pred_region
      %s28 = ssub.s32 8192, 8192
      %29 = vsyncadd [#allocation6], %s28
      %s30 = sshll.u32 [#allocation5], 4
      %s31 = int_to_ptr.vmem [resolvable:$true] %s30
      %36 = dma.hbm_to_vmem [thread:$0]  %s1, 8192, %s31, [#allocation6], 512, 512, 32
    $region9: #{tpu_custom_call.1} parent=1 // pred_fallthru
      _
    // Predicated region
    $region10: #{tpu_custom_call.1} parent=1 // pred_check
      _
    $region11: #{tpu_custom_call.1} parent=1 // pred_check_branch
      %38 = sbr.rel (0) target = $region13
    $region12: #{tpu_custom_call.1} parent=1 // pred_region
      _
    $region13: #{tpu_custom_call.1} parent=1 // pred_fallthru
      _
    // Predicated region
    $region14: #{tpu_custom_call.1} parent=1 // pred_check
      _
    $region15: #{tpu_custom_call.1} parent=1 // pred_check_branch
      %40 = sbr.rel (0) target = $region17
    $region16: #{tpu_custom_call.1} parent=1 // pred_region
      %s42 = ssub.s32 8192, 8192
      %43 = vsyncadd [#allocation6], %s42
      %s44 = sshll.u32 [#allocation7], 4
      %s45 = int_to_ptr.vmem [resolvable:$true] %s44
      %50 = dma.hbm_to_vmem [thread:$0]  %s3, 8192, %s45, [#allocation6], 128, 128, 8
    $region17: #{tpu_custom_call.1} parent=1 // pred_fallthru
      _
    // Predicated region
    $region18: #{tpu_custom_call.1} parent=1 // pred_check
      _
    $region19: #{tpu_custom_call.1} parent=1 // pred_check_branch
      %52 = sbr.rel (0) target = $region21
    $region20: #{tpu_custom_call.1} parent=1 // pred_region
      _
    $region21: #{tpu_custom_call.1} parent=1 // pred_fallthru
      _
    // Predicated region
    $region22: #{tpu_custom_call.1} parent=1 // pred_check
      _
    $region23: #{tpu_custom_call.1} parent=1 // pred_check_branch
      %54 = sbr.rel (0) target = $region25
    $region24: #{tpu_custom_call.1} parent=1 // pred_region
      %55 = dma.done [#allocation3], 256
    $region25: #{tpu_custom_call.1} parent=1 // pred_fallthru
      _
    // Predicated region
    $region26: #{tpu_custom_call.1} parent=1 // pred_check
      _
    $region27: #{tpu_custom_call.1} parent=1 // pred_check_branch
      %57 = sbr.rel (0) target = $region29
    $region28: #{tpu_custom_call.1} parent=1 // pred_region
      %58 = dma.done [#allocation6], 8192
    $region29: #{tpu_custom_call.1} parent=1 // pred_fallthru
      _
    // Predicated region
    $region30: #{tpu_custom_call.1} parent=1 // pred_check
      _
    $region31: #{tpu_custom_call.1} parent=1 // pred_check_branch
      %60 = sbr.rel (0) target = $region33
    $region32: #{tpu_custom_call.1} parent=1 // pred_region
      %61 = dma.done [#allocation6], 8192
    $region33: #{tpu_custom_call.1} parent=1 // pred_fallthru
      _
    %v62 = vld [vmem:[#allocation2] sm:$0xff]
    %v63 = vld [vmem:[#allocation2 + $0x8] sm:$0xff]
    %v64 = vld [vmem:[#allocation5] sm:$0xff]
    %v65 = vld [vmem:[#allocation5 + $0x8] sm:$0xff]
    %v66 = vld [vmem:[#allocation5 + $0x10] sm:$0xff]
    %v67 = vld [vmem:[#allocation5 + $0x18] sm:$0xff]
    %v68 = vld [vmem:[#allocation5 + $0x20] sm:$0xff]
    %v69 = vld [vmem:[#allocation5 + $0x28] sm:$0xff]
    %v70 = vld [vmem:[#allocation5 + $0x30] sm:$0xff]
    %v71 = vld [vmem:[#allocation5 + $0x38] sm:$0xff]
    %v72 = vld [vmem:[#allocation5 + $0x40] sm:$0xff]
    %v73 = vld [vmem:[#allocation5 + $0x48] sm:$0xff]
    %v74 = vld [vmem:[#allocation5 + $0x50] sm:$0xff]
    %v75 = vld [vmem:[#allocation5 + $0x58] sm:$0xff]
    %v76 = vld [vmem:[#allocation5 + $0x60] sm:$0xff]
    %v77 = vld [vmem:[#allocation5 + $0x68] sm:$0xff]
    %v78 = vld [vmem:[#allocation5 + $0x70] sm:$0xff]
    %v79 = vld [vmem:[#allocation5 + $0x78] sm:$0xff]
    %v80 = vld [vmem:[#allocation5 + $0x80] sm:$0xff]
    %v81 = vld [vmem:[#allocation5 + $0x88] sm:$0xff]
    %v82 = vld [vmem:[#allocation5 + $0x90] sm:$0xff]
    %v83 = vld [vmem:[#allocation5 + $0x98] sm:$0xff]
    %v84 = vld [vmem:[#allocation5 + $0xa0] sm:$0xff]
    %v85 = vld [vmem:[#allocation5 + $0xa8] sm:$0xff]
    %v86 = vld [vmem:[#allocation5 + $0xb0] sm:$0xff]
    %v87 = vld [vmem:[#allocation5 + $0xb8] sm:$0xff]
    %v88 = vld [vmem:[#allocation5 + $0xc0] sm:$0xff]
    %v89 = vld [vmem:[#allocation5 + $0xc8] sm:$0xff]
    %v90 = vld [vmem:[#allocation5 + $0xd0] sm:$0xff]
    %v91 = vld [vmem:[#allocation5 + $0xd8] sm:$0xff]
    %v92 = vld [vmem:[#allocation5 + $0xe0] sm:$0xff]
    %v93 = vld [vmem:[#allocation5 + $0xe8] sm:$0xff]
    %v94 = vld [vmem:[#allocation5 + $0xf0] sm:$0xff]
    %v95 = vld [vmem:[#allocation5 + $0xf8] sm:$0xff]
    %v96 = vld [vmem:[#allocation5 + $0x100] sm:$0xff]
    %v97 = vld [vmem:[#allocation5 + $0x108] sm:$0xff]
    %v98 = vld [vmem:[#allocation5 + $0x110] sm:$0xff]
    %v99 = vld [vmem:[#allocation5 + $0x118] sm:$0xff]
    %v100 = vld [vmem:[#allocation5 + $0x120] sm:$0xff]
    %v101 = vld [vmem:[#allocation5 + $0x128] sm:$0xff]
    %v102 = vld [vmem:[#allocation5 + $0x130] sm:$0xff]
    %v103 = vld [vmem:[#allocation5 + $0x138] sm:$0xff]
    %v104 = vld [vmem:[#allocation5 + $0x140] sm:$0xff]
    %v105 = vld [vmem:[#allocation5 + $0x148] sm:$0xff]
    %v106 = vld [vmem:[#allocation5 + $0x150] sm:$0xff]
    %v107 = vld [vmem:[#allocation5 + $0x158] sm:$0xff]
    %v108 = vld [vmem:[#allocation5 + $0x160] sm:$0xff]
    %v109 = vld [vmem:[#allocation5 + $0x168] sm:$0xff]
    %v110 = vld [vmem:[#allocation5 + $0x170] sm:$0xff]
    %v111 = vld [vmem:[#allocation5 + $0x178] sm:$0xff]
    %v112 = vld [vmem:[#allocation5 + $0x180] sm:$0xff]
    %v113 = vld [vmem:[#allocation5 + $0x188] sm:$0xff]
    %v114 = vld [vmem:[#allocation5 + $0x190] sm:$0xff]
    %v115 = vld [vmem:[#allocation5 + $0x198] sm:$0xff]
    %v116 = vld [vmem:[#allocation5 + $0x1a0] sm:$0xff]
    %v117 = vld [vmem:[#allocation5 + $0x1a8] sm:$0xff]
    %v118 = vld [vmem:[#allocation5 + $0x1b0] sm:$0xff]
    %v119 = vld [vmem:[#allocation5 + $0x1b8] sm:$0xff]
    %v120 = vld [vmem:[#allocation5 + $0x1c0] sm:$0xff]
    %v121 = vld [vmem:[#allocation5 + $0x1c8] sm:$0xff]
    %v122 = vld [vmem:[#allocation5 + $0x1d0] sm:$0xff]
    %v123 = vld [vmem:[#allocation5 + $0x1d8] sm:$0xff]
    %v124 = vld [vmem:[#allocation5 + $0x1e0] sm:$0xff]
    %v125 = vld [vmem:[#allocation5 + $0x1e8] sm:$0xff]
    %v126 = vld [vmem:[#allocation5 + $0x1f0] sm:$0xff]
    %v127 = vld [vmem:[#allocation5 + $0x1f8] sm:$0xff]
    %v128 = vld [vmem:[%s2] sm:$0xf]
    %v130 = vlaneseq
    %v131 = vshrl.u32 %v130, 7
    %v132 = vsub.s32 0, %v131
    %v133 = vrot.slane %v128, %v132
    %v134 = vlaneseq
    %v135 = vshrl.u32 %v134, 7
    %v136 = vsub.s32 1, %v135
    %v137 = vrot.slane %v128, %v136
    %v138 = vlaneseq
    %v139 = vshrl.u32 %v138, 7
    %v140 = vsub.s32 2, %v139
    %v141 = vrot.slane %v128, %v140
    %v142 = vlaneseq
    %v143 = vshrl.u32 %v142, 7
    %v144 = vsub.s32 3, %v143
    %v145 = vrot.slane %v128, %v144
    %150 = vmatprep.subr.mxu0 %v65
    %151 = vmatpush1.msra.mxu0 %v64
    %152 = vmatprep.subr.mxu0 %v69
    %153 = vmatpush1.msra.mxu0 %v68
    %154 = vmatprep.subr.mxu0 %v73
    %155 = vmatpush1.msra.mxu0 %v72
    %156 = vmatprep.subr.mxu0 %v77
    %157 = vmatpush1.msra.mxu0 %v76
    %158 = vmatprep.subr.mxu0 %v81
    %159 = vmatpush1.msra.mxu0 %v80
    %160 = vmatprep.subr.mxu0 %v85
    %161 = vmatpush1.msra.mxu0 %v84
    %162 = vmatprep.subr.mxu0 %v89
    %163 = vmatpush1.msra.mxu0 %v88
    %164 = vmatprep.subr.mxu0 %v93
    %165 = vmatpush1.msra.mxu0 %v92
    %166 = vmatprep.subr.mxu0 %v97
    %167 = vmatpush1.msra.mxu0 %v96
    %168 = vmatprep.subr.mxu0 %v101
    %169 = vmatpush1.msra.mxu0 %v100
    %170 = vmatprep.subr.mxu0 %v105
    %171 = vmatpush1.msra.mxu0 %v104
    %172 = vmatprep.subr.mxu0 %v109
    %173 = vmatpush1.msra.mxu0 %v108
    %174 = vmatprep.subr.mxu0 %v113
    %175 = vmatpush1.msra.mxu0 %v112
    %176 = vmatprep.subr.mxu0 %v117
    %177 = vmatpush1.msra.mxu0 %v116
    %178 = vmatprep.subr.mxu0 %v121
    %179 = vmatpush1.msra.mxu0 %v120
    %180 = vmatprep.subr.mxu0 %v125
    %181 = vmatpush1.msra.mxu0 %v124
    %182 = vmatprep.subr.mxu0 0.0
    %183 = vmatpush1.msra.mxu0 0.0
    %184 = vmatprep.subr.mxu0 0.0
    %185 = vmatpush1.msra.mxu0 0.0
    %186 = vmatprep.subr.mxu0 0.0
    %187 = vmatpush1.msra.mxu0 0.0
    %188 = vmatprep.subr.mxu0 0.0
    %189 = vmatpush1.msra.mxu0 0.0
    %190 = vmatprep.subr.mxu0 0.0
    %191 = vmatpush1.msra.mxu0 0.0
    %192 = vmatprep.subr.mxu0 0.0
    %193 = vmatpush1.msra.mxu0 0.0
    %194 = vmatprep.subr.mxu0 0.0
    %195 = vmatpush1.msra.mxu0 0.0
    %196 = vmatprep.subr.mxu0 0.0
    %197 = vmatpush1.msra.mxu0 0.0
    %198 = vmatprep.subr.mxu0 0.0
    %199 = vmatpush1.msra.mxu0 0.0
    %200 = vmatprep.subr.mxu0 0.0
    %201 = vmatpush1.msra.mxu0 0.0
    %202 = vmatprep.subr.mxu0 0.0
    %203 = vmatpush1.msra.mxu0 0.0
    %204 = vmatprep.subr.mxu0 0.0
    %205 = vmatpush1.msra.mxu0 0.0
    %206 = vmatprep.subr.mxu0 0.0
    %207 = vmatpush1.msra.mxu0 0.0
    %208 = vmatprep.subr.mxu0 0.0
    %209 = vmatpush1.msra.mxu0 0.0
    %210 = vmatprep.subr.mxu0 0.0
    %211 = vmatpush1.msra.mxu0 0.0
    %212 = vmatprep.subr.mxu0 0.0
    %213 = vmatpush1.msra.mxu0 0.0
    %214 = vmatprep.mubr.f32.mxu0 0.0
    %215 = vmatmul.mubr.f32.gmra.mrb[0].mxu0 %v62
    %v216 = vpop.f32.mrb[0].mxu0
    %v217 = vadd.f32 %v133, %v216
    %v218 = vpop.f32.mrb[0].mxu0
    %v219 = vadd.f32 %v137, %v218
    %220 = vmatprep.mubr.f32.mxu0 0.0
    %221 = vmatmul.mubr.f32.gmra.mrb[0].mxu0 %v63
    %v222 = vpop.f32.mrb[0].mxu0
    %v223 = vadd.f32 %v133, %v222
    %v224 = vpop.f32.mrb[0].mxu0
    %v225 = vadd.f32 %v137, %v224
    %226 = vdwg.mxu0
    %227 = vmatprep.subr.mxu0 %v67
    %228 = vmatpush1.msra.mxu0 %v66
    %229 = vmatprep.subr.mxu0 %v71
    %230 = vmatpush1.msra.mxu0 %v70
    %231 = vmatprep.subr.mxu0 %v75
    %232 = vmatpush1.msra.mxu0 %v74
    %233 = vmatprep.subr.mxu0 %v79
    %234 = vmatpush1.msra.mxu0 %v78
    %235 = vmatprep.subr.mxu0 %v83
    %236 = vmatpush1.msra.mxu0 %v82
    %237 = vmatprep.subr.mxu0 %v87
    %238 = vmatpush1.msra.mxu0 %v86
    %239 = vmatprep.subr.mxu0 %v91
    %240 = vmatpush1.msra.mxu0 %v90
    %241 = vmatprep.subr.mxu0 %v95
    %242 = vmatpush1.msra.mxu0 %v94
    %243 = vmatprep.subr.mxu0 %v99
    %244 = vmatpush1.msra.mxu0 %v98
    %245 = vmatprep.subr.mxu0 %v103
    %246 = vmatpush1.msra.mxu0 %v102
    %247 = vmatprep.subr.mxu0 %v107
    %248 = vmatpush1.msra.mxu0 %v106
    %249 = vmatprep.subr.mxu0 %v111
    %250 = vmatpush1.msra.mxu0 %v110
    %251 = vmatprep.subr.mxu0 %v115
    %252 = vmatpush1.msra.mxu0 %v114
    %253 = vmatprep.subr.mxu0 %v119
    %254 = vmatpush1.msra.mxu0 %v118
    %255 = vmatprep.subr.mxu0 %v123
    %256 = vmatpush1.msra.mxu0 %v122
    %257 = vmatprep.subr.mxu0 %v127
    %258 = vmatpush1.msra.mxu0 %v126
    %259 = vmatprep.subr.mxu0 0.0
    %260 = vmatpush1.msra.mxu0 0.0
    %261 = vmatprep.subr.mxu0 0.0
    %262 = vmatpush1.msra.mxu0 0.0
    %263 = vmatprep.subr.mxu0 0.0
    %264 = vmatpush1.msra.mxu0 0.0
    %265 = vmatprep.subr.mxu0 0.0
    %266 = vmatpush1.msra.mxu0 0.0
    %267 = vmatprep.subr.mxu0 0.0
    %268 = vmatpush1.msra.mxu0 0.0
    %269 = vmatprep.subr.mxu0 0.0
    %270 = vmatpush1.msra.mxu0 0.0
    %271 = vmatprep.subr.mxu0 0.0
    %272 = vmatpush1.msra.mxu0 0.0
    %273 = vmatprep.subr.mxu0 0.0
    %274 = vmatpush1.msra.mxu0 0.0
    %275 = vmatprep.subr.mxu0 0.0
    %276 = vmatpush1.msra.mxu0 0.0
    %277 = vmatprep.subr.mxu0 0.0
    %278 = vmatpush1.msra.mxu0 0.0
    %279 = vmatprep.subr.mxu0 0.0
    %280 = vmatpush1.msra.mxu0 0.0
    %281 = vmatprep.subr.mxu0 0.0
    %282 = vmatpush1.msra.mxu0 0.0
    %283 = vmatprep.subr.mxu0 0.0
    %284 = vmatpush1.msra.mxu0 0.0
    %285 = vmatprep.subr.mxu0 0.0
    %286 = vmatpush1.msra.mxu0 0.0
    %287 = vmatprep.subr.mxu0 0.0
    %288 = vmatpush1.msra.mxu0 0.0
    %289 = vmatprep.subr.mxu0 0.0
    %290 = vmatpush1.msra.mxu0 0.0
    %291 = vmatprep.mubr.f32.mxu0 0.0
    %292 = vmatmul.mubr.f32.gmra.mrb[0].mxu0 %v62
    %v293 = vpop.f32.mrb[0].mxu0
    %v294 = vadd.f32 %v141, %v293
    %v295 = vpop.f32.mrb[0].mxu0
    %v296 = vadd.f32 %v145, %v295
    %297 = vmatprep.mubr.f32.mxu0 0.0
    %298 = vmatmul.mubr.f32.gmra.mrb[0].mxu0 %v63
    %v299 = vpop.f32.mrb[0].mxu0
    %v300 = vadd.f32 %v141, %v299
    %v301 = vpop.f32.mrb[0].mxu0
    %v302 = vadd.f32 %v145, %v301
    %303 = vdwg.mxu0
    %v304 = vmax.f32 %v217, 0.0
    %v305 = vmax.f32 %v219, 0.0
    %v306 = vmax.f32 %v294, 0.0
    %v307 = vmax.f32 %v296, 0.0
    %v308 = vmax.f32 %v223, 0.0
    %v309 = vmax.f32 %v225, 0.0
    %v310 = vmax.f32 %v300, 0.0
    %v311 = vmax.f32 %v302, 0.0
    %v312 = vld [vmem:[#allocation7] sm:$0xff]
    %v313 = vld [vmem:[#allocation7 + $0x8] sm:$0xff]
    %v314 = vld [vmem:[#allocation7 + $0x10] sm:$0xff]
    %v315 = vld [vmem:[#allocation7 + $0x18] sm:$0xff]
    %v316 = vld [vmem:[#allocation7 + $0x20] sm:$0xff]
    %v317 = vld [vmem:[#allocation7 + $0x28] sm:$0xff]
    %v318 = vld [vmem:[#allocation7 + $0x30] sm:$0xff]
    %v319 = vld [vmem:[#allocation7 + $0x38] sm:$0xff]
    %v320 = vld [vmem:[#allocation7 + $0x40] sm:$0xff]
    %v321 = vld [vmem:[#allocation7 + $0x48] sm:$0xff]
    %v322 = vld [vmem:[#allocation7 + $0x50] sm:$0xff]
    %v323 = vld [vmem:[#allocation7 + $0x58] sm:$0xff]
    %v324 = vld [vmem:[#allocation7 + $0x60] sm:$0xff]
    %v325 = vld [vmem:[#allocation7 + $0x68] sm:$0xff]
    %v326 = vld [vmem:[#allocation7 + $0x70] sm:$0xff]
    %v327 = vld [vmem:[#allocation7 + $0x78] sm:$0xff]
    %v328 = vld [vmem:[#allocation7 + $0x80] sm:$0xff]
    %v329 = vld [vmem:[#allocation7 + $0x88] sm:$0xff]
    %v330 = vld [vmem:[#allocation7 + $0x90] sm:$0xff]
    %v331 = vld [vmem:[#allocation7 + $0x98] sm:$0xff]
    %v332 = vld [vmem:[#allocation7 + $0xa0] sm:$0xff]
    %v333 = vld [vmem:[#allocation7 + $0xa8] sm:$0xff]
    %v334 = vld [vmem:[#allocation7 + $0xb0] sm:$0xff]
    %v335 = vld [vmem:[#allocation7 + $0xb8] sm:$0xff]
    %v336 = vld [vmem:[#allocation7 + $0xc0] sm:$0xff]
    %v337 = vld [vmem:[#allocation7 + $0xc8] sm:$0xff]
    %v338 = vld [vmem:[#allocation7 + $0xd0] sm:$0xff]
    %v339 = vld [vmem:[#allocation7 + $0xd8] sm:$0xff]
    %v340 = vld [vmem:[#allocation7 + $0xe0] sm:$0xff]
    %v341 = vld [vmem:[#allocation7 + $0xe8] sm:$0xff]
    %v342 = vld [vmem:[#allocation7 + $0xf0] sm:$0xff]
    %v343 = vld [vmem:[#allocation7 + $0xf8] sm:$0xff]
    %v344 = vld [vmem:[#allocation7 + $0x100] sm:$0xff]
    %v345 = vld [vmem:[#allocation7 + $0x108] sm:$0xff]
    %v346 = vld [vmem:[#allocation7 + $0x110] sm:$0xff]
    %v347 = vld [vmem:[#allocation7 + $0x118] sm:$0xff]
    %v348 = vld [vmem:[#allocation7 + $0x120] sm:$0xff]
    %v349 = vld [vmem:[#allocation7 + $0x128] sm:$0xff]
    %v350 = vld [vmem:[#allocation7 + $0x130] sm:$0xff]
    %v351 = vld [vmem:[#allocation7 + $0x138] sm:$0xff]
    %v352 = vld [vmem:[#allocation7 + $0x140] sm:$0xff]
    %v353 = vld [vmem:[#allocation7 + $0x148] sm:$0xff]
    %v354 = vld [vmem:[#allocation7 + $0x150] sm:$0xff]
    %v355 = vld [vmem:[#allocation7 + $0x158] sm:$0xff]
    %v356 = vld [vmem:[#allocation7 + $0x160] sm:$0xff]
    %v357 = vld [vmem:[#allocation7 + $0x168] sm:$0xff]
    %v358 = vld [vmem:[#allocation7 + $0x170] sm:$0xff]
    %v359 = vld [vmem:[#allocation7 + $0x178] sm:$0xff]
    %v360 = vld [vmem:[#allocation7 + $0x180] sm:$0xff]
    %v361 = vld [vmem:[#allocation7 + $0x188] sm:$0xff]
    %v362 = vld [vmem:[#allocation7 + $0x190] sm:$0xff]
    %v363 = vld [vmem:[#allocation7 + $0x198] sm:$0xff]
    %v364 = vld [vmem:[#allocation7 + $0x1a0] sm:$0xff]
    %v365 = vld [vmem:[#allocation7 + $0x1a8] sm:$0xff]
    %v366 = vld [vmem:[#allocation7 + $0x1b0] sm:$0xff]
    %v367 = vld [vmem:[#allocation7 + $0x1b8] sm:$0xff]
    %v368 = vld [vmem:[#allocation7 + $0x1c0] sm:$0xff]
    %v369 = vld [vmem:[#allocation7 + $0x1c8] sm:$0xff]
    %v370 = vld [vmem:[#allocation7 + $0x1d0] sm:$0xff]
    %v371 = vld [vmem:[#allocation7 + $0x1d8] sm:$0xff]
    %v372 = vld [vmem:[#allocation7 + $0x1e0] sm:$0xff]
    %v373 = vld [vmem:[#allocation7 + $0x1e8] sm:$0xff]
    %v374 = vld [vmem:[#allocation7 + $0x1f0] sm:$0xff]
    %v375 = vld [vmem:[#allocation7 + $0x1f8] sm:$0xff]
    %v376 = vld [vmem:[%s4] sm:$0x1]
    %v378 = vlaneseq
    %v379 = vshrl.u32 %v378, 7
    %v380 = vsub.s32 0, %v379
    %v381 = vrot.slane %v376, %v380
    %383 = vmatprep.subr.mxu0 0.0
    %384 = vmatpush1.msra.mxu0 %v312
    %385 = vmatprep.subr.mxu0 0.0
    %386 = vmatpush1.msra.mxu0 %v313
    %387 = vmatprep.subr.mxu0 0.0
    %388 = vmatpush1.msra.mxu0 %v314
    %389 = vmatprep.subr.mxu0 0.0
    %390 = vmatpush1.msra.mxu0 %v315
    %391 = vmatprep.subr.mxu0 0.0
    %392 = vmatpush1.msra.mxu0 %v316
    %393 = vmatprep.subr.mxu0 0.0
    %394 = vmatpush1.msra.mxu0 %v317
    %395 = vmatprep.subr.mxu0 0.0
    %396 = vmatpush1.msra.mxu0 %v318
    %397 = vmatprep.subr.mxu0 0.0
    %398 = vmatpush1.msra.mxu0 %v319
    %399 = vmatprep.subr.mxu0 0.0
    %400 = vmatpush1.msra.mxu0 %v320
    %401 = vmatprep.subr.mxu0 0.0
    %402 = vmatpush1.msra.mxu0 %v321
    %403 = vmatprep.subr.mxu0 0.0
    %404 = vmatpush1.msra.mxu0 %v322
    %405 = vmatprep.subr.mxu0 0.0
    %406 = vmatpush1.msra.mxu0 %v323
    %407 = vmatprep.subr.mxu0 0.0
    %408 = vmatpush1.msra.mxu0 %v324
    %409 = vmatprep.subr.mxu0 0.0
    %410 = vmatpush1.msra.mxu0 %v325
    %411 = vmatprep.subr.mxu0 0.0
    %412 = vmatpush1.msra.mxu0 %v326
    %413 = vmatprep.subr.mxu0 0.0
    %414 = vmatpush1.msra.mxu0 %v327
    %415 = vmatprep.subr.mxu0 0.0
    %416 = vmatpush1.msra.mxu0 %v328
    %417 = vmatprep.subr.mxu0 0.0
    %418 = vmatpush1.msra.mxu0 %v329
    %419 = vmatprep.subr.mxu0 0.0
    %420 = vmatpush1.msra.mxu0 %v330
    %421 = vmatprep.subr.mxu0 0.0
    %422 = vmatpush1.msra.mxu0 %v331
    %423 = vmatprep.subr.mxu0 0.0
    %424 = vmatpush1.msra.mxu0 %v332
    %425 = vmatprep.subr.mxu0 0.0
    %426 = vmatpush1.msra.mxu0 %v333
    %427 = vmatprep.subr.mxu0 0.0
    %428 = vmatpush1.msra.mxu0 %v334
    %429 = vmatprep.subr.mxu0 0.0
    %430 = vmatpush1.msra.mxu0 %v335
    %431 = vmatprep.subr.mxu0 0.0
    %432 = vmatpush1.msra.mxu0 %v336
    %433 = vmatprep.subr.mxu0 0.0
    %434 = vmatpush1.msra.mxu0 %v337
    %435 = vmatprep.subr.mxu0 0.0
    %436 = vmatpush1.msra.mxu0 %v338
    %437 = vmatprep.subr.mxu0 0.0
    %438 = vmatpush1.msra.mxu0 %v339
    %439 = vmatprep.subr.mxu0 0.0
    %440 = vmatpush1.msra.mxu0 %v340
    %441 = vmatprep.subr.mxu0 0.0
    %442 = vmatpush1.msra.mxu0 %v341
    %443 = vmatprep.subr.mxu0 0.0
    %444 = vmatpush1.msra.mxu0 %v342
    %445 = vmatprep.subr.mxu0 0.0
    %446 = vmatpush1.msra.mxu0 %v343
    %447 = vmatprep.mubr.f32.mxu0 %v305
    %448 = vmatmul.mubr.f32.gmra.mrb[0].mxu0 %v304
    %v449 = vpop.f32.mrb[0].mxu0
    %v450 = vadd.f32 %v381, %v449
    %v451 = vpop.f32.mrb[0].mxu0
    %452 = vmatprep.mubr.f32.mxu0 %v309
    %453 = vmatmul.mubr.f32.gmra.mrb[0].mxu0 %v308
    %v454 = vpop.f32.mrb[0].mxu0
    %v455 = vadd.f32 %v381, %v454
    %v456 = vpop.f32.mrb[0].mxu0
    %457 = vdwg.mxu0
    %458 = vmatprep.subr.mxu0 0.0
    %459 = vmatpush1.msra.mxu0 %v344
    %460 = vmatprep.subr.mxu0 0.0
    %461 = vmatpush1.msra.mxu0 %v345
    %462 = vmatprep.subr.mxu0 0.0
    %463 = vmatpush1.msra.mxu0 %v346
    %464 = vmatprep.subr.mxu0 0.0
    %465 = vmatpush1.msra.mxu0 %v347
    %466 = vmatprep.subr.mxu0 0.0
    %467 = vmatpush1.msra.mxu0 %v348
    %468 = vmatprep.subr.mxu0 0.0
    %469 = vmatpush1.msra.mxu0 %v349
    %470 = vmatprep.subr.mxu0 0.0
    %471 = vmatpush1.msra.mxu0 %v350
    %472 = vmatprep.subr.mxu0 0.0
    %473 = vmatpush1.msra.mxu0 %v351
    %474 = vmatprep.subr.mxu0 0.0
    %475 = vmatpush1.msra.mxu0 %v352
    %476 = vmatprep.subr.mxu0 0.0
    %477 = vmatpush1.msra.mxu0 %v353
    %478 = vmatprep.subr.mxu0 0.0
    %479 = vmatpush1.msra.mxu0 %v354
    %480 = vmatprep.subr.mxu0 0.0
    %481 = vmatpush1.msra.mxu0 %v355
    %482 = vmatprep.subr.mxu0 0.0
    %483 = vmatpush1.msra.mxu0 %v356
    %484 = vmatprep.subr.mxu0 0.0
    %485 = vmatpush1.msra.mxu0 %v357
    %486 = vmatprep.subr.mxu0 0.0
    %487 = vmatpush1.msra.mxu0 %v358
    %488 = vmatprep.subr.mxu0 0.0
    %489 = vmatpush1.msra.mxu0 %v359
    %490 = vmatprep.subr.mxu0 0.0
    %491 = vmatpush1.msra.mxu0 %v360
    %492 = vmatprep.subr.mxu0 0.0
    %493 = vmatpush1.msra.mxu0 %v361
    %494 = vmatprep.subr.mxu0 0.0
    %495 = vmatpush1.msra.mxu0 %v362
    %496 = vmatprep.subr.mxu0 0.0
    %497 = vmatpush1.msra.mxu0 %v363
    %498 = vmatprep.subr.mxu0 0.0
    %499 = vmatpush1.msra.mxu0 %v364
    %500 = vmatprep.subr.mxu0 0.0
    %501 = vmatpush1.msra.mxu0 %v365
    %502 = vmatprep.subr.mxu0 0.0
    %503 = vmatpush1.msra.mxu0 %v366
    %504 = vmatprep.subr.mxu0 0.0
    %505 = vmatpush1.msra.mxu0 %v367
    %506 = vmatprep.subr.mxu0 0.0
    %507 = vmatpush1.msra.mxu0 %v368
    %508 = vmatprep.subr.mxu0 0.0
    %509 = vmatpush1.msra.mxu0 %v369
    %510 = vmatprep.subr.mxu0 0.0
    %511 = vmatpush1.msra.mxu0 %v370
    %512 = vmatprep.subr.mxu0 0.0
    %513 = vmatpush1.msra.mxu0 %v371
    %514 = vmatprep.subr.mxu0 0.0
    %515 = vmatpush1.msra.mxu0 %v372
    %516 = vmatprep.subr.mxu0 0.0
    %517 = vmatpush1.msra.mxu0 %v373
    %518 = vmatprep.subr.mxu0 0.0
    %519 = vmatpush1.msra.mxu0 %v374
    %520 = vmatprep.subr.mxu0 0.0
    %521 = vmatpush1.msra.mxu0 %v375
    %522 = vmatprep.mubr.f32.mxu0 %v307
    %523 = vmatmul.mubr.f32.gmra.mrb[0].mxu0 %v306
    %v524 = vpop.f32.mrb[0].mxu0
    %v525 = vadd.f32 %v450, %v524
    %v526 = vpop.f32.mrb[0].mxu0
    %527 = vmatprep.mubr.f32.mxu0 %v311
    %528 = vmatmul.mubr.f32.gmra.mrb[0].mxu0 %v310
    %v529 = vpop.f32.mrb[0].mxu0
    %v530 = vadd.f32 %v455, %v529
    %v531 = vpop.f32.mrb[0].mxu0
    %532 = vdwg.mxu0
    %533 = vst [vmem:[#allocation8] sm:$0xff] %v525
    %534 = vst [vmem:[#allocation8 + $0x8] sm:$0xff] %v530
    // Predicated region
    $region34: #{tpu_custom_call.1} parent=1 // pred_check
      _
    $region35: #{tpu_custom_call.1} parent=1 // pred_check_branch
      %536 = sbr.rel (0) target = $region37
    $region36: #{tpu_custom_call.1} parent=1 // pred_region
      %s538 = ssub.s32 256, 256
      %539 = vsyncadd [#allocation4], %s538
      %s540 = sshll.u32 [#allocation8], 4
      %s541 = int_to_ptr.vmem [resolvable:$true] %s540
      %546 = dma.vmem_to_hbm [thread:$0]  %s541, 256, %s5, [#allocation4], 128, 128, 8
    $region37: #{tpu_custom_call.1} parent=1 // pred_fallthru
      _
    // Predicated region
    $region38: #{tpu_custom_call.1} parent=1 // pred_check
      _
    $region39: #{tpu_custom_call.1} parent=1 // pred_check_branch
      %548 = sbr.rel (0) target = $region41
    $region40: #{tpu_custom_call.1} parent=1 // pred_region
      %549 = dma.done [#allocation4], 256
    $region41: #{tpu_custom_call.1} parent=1 // pred_fallthru
      _
    %550 = vsyncpa [#allocation3], 1
    %551 = vsyncpa [#allocation6], 1
    %552 = vsyncpa [#allocation4], 1

</llo_original>
